<compile_context>
chip_gen: v5e
topology: v5e:2x2
jax: 0.10.0
libtpu: 0.0.40
codegen_flags: <defaults>
</compile_context>

<pallas_src>
import math

import jax
import jax.numpy as jnp
from jax.experimental import pallas as pl
from jax.experimental.pallas import tpu as pltpu

_LANE = 128


def build_sinusoidal_pe(max_len, d_model, dtype=jnp.float32):
    """Equivalent of the torch module's __init__-time `pe` buffer: (max_len, d_model).

    Built once at "module init" time in plain JAX (init-time glue), cast to the
    activation dtype so the in-kernel add has matching dtypes.
    """
    position = jnp.arange(max_len, dtype=jnp.float32)[:, None]                 # (L, 1)
    div_term = jnp.exp(
        jnp.arange(0, d_model, 2, dtype=jnp.float32) * (-math.log(10000.0) / d_model)
    )                                                                          # (ceil(D/2),)
    angles = position * div_term[None, :]                                      # (L, ceil(D/2))
    pe = jnp.zeros((max_len, d_model), jnp.float32)
    pe = pe.at[:, 0::2].set(jnp.sin(angles))
    pe = pe.at[:, 1::2].set(jnp.cos(angles[:, : d_model // 2]))
    return pe.astype(dtype)


def _add_pe_kernel(x_ref, pe_ref, o_ref):
    # x_ref / o_ref: (tb, tf) flattened (batch, seq*d_model) tile.
    # pe_ref:        (1, tf) positional-encoding tile; its index_map ignores the
    #                batch grid axis (innermost), so it stays resident in VMEM
    #                across consecutive batch steps and is broadcast over rows.
    o_ref[...] = x_ref[...] + pe_ref[...]


def _vmem_capacity_bytes():
    try:
        return int(pltpu.get_tpu_info().vmem_capacity_bytes)
    except Exception:
        return 64 * 1024 * 1024  # conservative: smallest per-core VMEM (v7x)


def _choose_tiles(B, F, itemsize, vmem_bytes):
    """Pick (tb, tf): a ~4 MiB lane-dense block, clamped so the double-buffered
    working set (~2 in + 2 out + 2 pe blocks live) stays well inside VMEM."""
    target = min(4 * 1024 * 1024, max(512 * 1024, int(vmem_bytes * 0.4) // 5))

    # Batch tile: fold the whole batch unless a single 128-lane column slab of
    # the full batch already exceeds the target.  Block dims must be a multiple
    # of 8 or equal the full array dim.
    tb = B
    if B > 8 and B * _LANE * itemsize > target:
        tb = max(8, (target // (_LANE * itemsize)) // 8 * 8)
        tb = min(tb, (B // 8) * 8)

    # Flat (lane) tile: a multiple of 128 such that tb*tf*itemsize ~= target.
    n_lanes = -(-F // _LANE)
    tf_lanes = max(1, min(n_lanes, target // max(1, tb * _LANE * itemsize)))
    # v7x megacore: keep >= 2 steps on the leading (flat) grid axis whenever it
    # is splittable, so both TensorCores get work.
    if -(-n_lanes // tf_lanes) < 2 and n_lanes >= 2:
        tf_lanes = -(-n_lanes // 2)
    tf = tf_lanes * _LANE
    if tf >= F:
        tf = F  # full-dim block is always a legal (and lane-dense) layout
    return tb, tf


def positional_encoding_forward(x, pe):
    """Pallas forward pass of PositionalEncoding: x + pe[None, :x.shape[1], :].

    x : (B, S, D) activations.
    pe: (max_len, D) sinusoidal buffer with max_len >= S.
    Output has x.dtype (torch would promote half x + fp32 buffer to fp32).
    """
    B, S, D = x.shape
    assert pe.shape[0] >= S and pe.shape[1] == D, "pe buffer too small for this input"
    if pe.dtype != x.dtype:
        pe = pe.astype(x.dtype)  # normally done once at init; cheap fallback here

    F = S * D
    itemsize = x.dtype.itemsize
    vmem_bytes = _vmem_capacity_bytes()
    tb, tf = _choose_tiles(B, F, itemsize, vmem_bytes)

    # Free, contiguous reshapes -> lane-dense last axis of length S*D.
    x_flat = x.reshape(B, F)
    pe_flat = pe.reshape(1, pe.shape[0] * D)  # full buffer; columns >= F never written

    grid = (pl.cdiv(F, tf), pl.cdiv(B, tb))  # flat tiles outer, batch innermost

    working = (4 * tb * tf + 2 * tf) * itemsize            # double-buffered blocks
    vmem_limit = int(min(vmem_bytes, max(32 * 1024 * 1024, 2 * working)))

    out_flat = pl.pallas_call(
        _add_pe_kernel,
        out_shape=jax.ShapeDtypeStruct((B, F), x.dtype),
        grid=grid,
        in_specs=[
            pl.BlockSpec((tb, tf), lambda f, b: (b, f)),   # x tile
            pl.BlockSpec((1, tf), lambda f, b: (0, f)),    # pe tile (batch-invariant)
        ],
        out_specs=pl.BlockSpec((tb, tf), lambda f, b: (b, f)),
        compiler_params=pltpu.CompilerParams(
            dimension_semantics=("parallel", "parallel"),
            vmem_limit_bytes=vmem_limit,
        ),
        cost_estimate=pl.CostEstimate(
            flops=B * F,
            transcendentals=0,
            bytes_accessed=(2 * B * F + F) * itemsize,
        ),
    )(x_flat, pe_flat)
    return out_flat.reshape(B, S, D)


if __name__ == "__main__":
    # Small demo shapes consistent with the module: x is (batch, seq, d_model).
    d_model, max_len = 32, 2048
    batch, seq_len = 2, 16

    # Module-init glue: build the sinusoidal buffer once, in the activation dtype.
    pe = build_sinusoidal_pe(max_len, d_model, dtype=jnp.float32)

    key = jax.random.PRNGKey(0)
    x = jax.random.normal(key, (batch, seq_len, d_model), dtype=jnp.float32)

    out = positional_encoding_forward(x, pe)
    jax.block_until_ready(out)

    # Sanity check vs the pure-JAX reference of the torch forward pass.
    ref = x + pe[None, :seq_len, :]
    assert out.shape == x.shape and out.dtype == x.dtype
    assert jnp.allclose(out, ref, atol=1e-6, rtol=1e-6), "PositionalEncoding mismatch vs reference"

    print("KERNEL_OK")
</pallas_src>

<mosaic_0001>
module attributes {stable_mosaic.version = 11 : i64} {
  func.func @_add_pe_kernel(%arg0: i32, %arg1: i32, %arg2: memref<2x256xf32, #tpu.memory_space<vmem>>, %arg3: memref<1x256xf32, #tpu.memory_space<vmem>>, %arg4: memref<2x256xf32, #tpu.memory_space<vmem>>) attributes {dimension_semantics = [#tpu.dimension_semantics<parallel>, #tpu.dimension_semantics<parallel>], iteration_bounds = array<i64: 2, 1>, scalar_prefetch = 0 : i64, scratch_operands = 0 : i64, tpu.core_type = #tpu.core_type<tc>, window_params = [{transform_indices = @transform_0, window_bounds = array<i64: 2, 256>}, {transform_indices = @transform_1, window_bounds = array<i64: 1, 256>}, {transform_indices = @transform_2, window_bounds = array<i64: 2, 256>}]} {
    %c0 = arith.constant 0 : index
    %c0_0 = arith.constant 0 : index
    %0 = vector.load %arg2[%c0, %c0_0] : memref<2x256xf32, #tpu.memory_space<vmem>>, vector<2x256xf32>
    %c0_1 = arith.constant 0 : index
    %c0_2 = arith.constant 0 : index
    %1 = vector.load %arg3[%c0_1, %c0_2] : memref<1x256xf32, #tpu.memory_space<vmem>>, vector<1x256xf32>
    %2 = vector.broadcast %1 : vector<1x256xf32> to vector<2x256xf32>
    %3 = arith.addf %0, %2 : vector<2x256xf32>
    %c0_3 = arith.constant 0 : index
    %c0_4 = arith.constant 0 : index
    %4 = vector.load %arg4[%c0_3, %c0_4] : memref<2x256xf32, #tpu.memory_space<vmem>>, vector<2x256xf32>
    tpu.vector_store %arg4[%c0_3, %c0_4], %3 {strides = array<i32>} : memref<2x256xf32, #tpu.memory_space<vmem>>, vector<2x256xf32>,
    return
  }
  func.func @transform_0(%arg0: i32, %arg1: i32) -> (i32, i32) {
    %c0_i32 = arith.constant 0 : i32
    return %arg1, %arg0 : i32, i32
  }
  func.func @transform_1(%arg0: i32, %arg1: i32) -> (i32, i32) {
    %c0_i32 = arith.constant 0 : i32
    %c0_i32_0 = arith.constant 0 : i32
    return %c0_i32, %arg0 : i32, i32
  }
  func.func @transform_2(%arg0: i32, %arg1: i32) -> (i32, i32) {
    %c0_i32 = arith.constant 0 : i32
    return %arg1, %arg0 : i32, i32
  }
}

</mosaic_0001>

<llo_original>
// kernel: tpu_custom_call.1
$region0: #{tpu_custom_call.1}
  #allocation0 [shape = 'u32[]', space=smem, size = 0x4, offset = 0x4, fixed_abs, tag = 'smem constant byte address 0x4 - core index']
  #allocation1 [shape = 'u32[72,128]{1,0:T(1,128)}', space=vmem, size = 0x9000, scoped, tag = 'internal scratch']
  %s0 = inlined_call_operand.hbm [shape: f32[2,512], index: 0, kind: input, shape index: {}]
  %s1 = inlined_call_operand.hbm [shape: f32[1,65536], index: 1, kind: input, shape index: {}]
  %s2 = inlined_call_operand.hbm [shape: f32[2,512], index: 2, kind: output, shape index: {}]
  %s3 = sld [smem:[#allocation0]]
  $region49: #{tpu_custom_call.1} parent=0
    _
  %s5 = ssub.s32 1, %s3
  %s6 = scalar_select 0, %s5, %s3
  $region1: #{tpu_custom_call.1} parent=0
    #allocation2 [shape = 'u8[4096]{0}', space=vmem, size = 0x1000, scoped, tag = 'input window, operand 0']
    #allocation3 [shape = 's32[2]{0}', space=sflag, size = 0x8, scoped, tag = 'scoped memory for tpu_custom_call.1']
    #allocation4 [shape = 's32[2]{0}', space=sflag, size = 0x8, scoped, tag = 'scoped memory for tpu_custom_call.1']
    #allocation5 [shape = 'u8[2048]{0}', space=vmem, size = 0x800, scoped, tag = 'input window, operand 1']
    #allocation6 [shape = 's32[2]{0}', space=sflag, size = 0x8, scoped, tag = 'scoped memory for tpu_custom_call.1']
    #allocation7 [shape = 'u8[4096]{0}', space=vmem, size = 0x1000, scoped, tag = 'output window, operand 0']
    %7 = vsyncpa [#allocation3], 0
    %s8 = scalar_lea.sflag [#allocation3], 1
    %9 = vsyncpa %s8, 0
    %10 = vsyncpa [#allocation6], 0
    %s11 = scalar_lea.sflag [#allocation6], 1
    %12 = vsyncpa %s11, 0
    %13 = vsyncpa [#allocation4], 0
    %s14 = scalar_lea.sflag [#allocation4], 1
    %15 = vsyncpa %s14, 0
    loop: start=0, step=1, limit=4
    $region2: #{tpu_custom_call.1} parent=1 // loop_pre_header
      _
    $region3: #{tpu_custom_call.1} parent=1 // loop_header
      %s17 = sphi 0, %s21
      %p18 = scmp.ge.s32.totalorder %s17, 4
      %s24 = sphi 0, %s36
      %s25 = sphi 0, %s32
      %s26 = sphi 0, %s24
      %s27 = sphi 0, %s25
      %s28 = sphi 0, %s26
      %s29 = sphi 0, %s27
      %s41 = sphi 0, %s43
      %s44 = sphi 0, %s41
      %s45 = sphi 0, %s44
      %s61 = sphi 0, %s45
      %s67 = sphi 0, %s69
      %s70 = sphi 0, %s67
      %s71 = sphi 0, %s70
      %s87 = sphi 0, %s71
      %s95 = sphi 0, %s97
      %s98 = sphi 0, %s95
      %s99 = sphi 0, %s98
      %s115 = sphi 0, %s99
    $region4: #{tpu_custom_call.1} parent=1 // loop_header_branch
      %20 = sbr.rel (%p18) target = $region8
    $region5: #{tpu_custom_call.1} parent=1 // loop_body
      %s22 = ssub.s32 %s17, 1
      %s23 = ssub.s32 %s17, 2
      %s30 = sadd.s32 1, %s25
      %p31 = scmp.ge.s32.totalorder %s30, 1
      %s32 = scalar_select %p31, 0, %s30
      %s33 = sadd.s32 1, %s24
      %s34 = scalar_select %p31, %s33, %s24
      %p35 = scmp.ge.s32.totalorder %s34, 2
      %s36 = scalar_select %p35, 0, %s34
      %s37 = ssub.s32 %s25, %s32
      %s38 = ssub.s32 %s24, %s36
      %s39 = sor.u32 %s37, %s38
      %p40 = scmp.eq.s32.totalorder %s39, 0
      %s42 = sadd.s32 %s41, 1
      %s43 = scalar_select %p40, %s41, %s42
      %p46 = pneg %p40
      %p47 = scmp.eq.s32.totalorder %s17, 1
      %p48 = por %p46, %p47
      %p49 = scmp.ne.s32.totalorder %s41, %s44
      %p50 = scmp.eq.s32.totalorder %s17, 0
      %p51 = por %p49, %p50
      %p52 = scmp.ne.s32.totalorder %s41, %s44
      %p53 = scmp.eq.s32.totalorder %s22, 1
      %p54 = por %p52, %p53
      %p55 = scmp.ne.s32.totalorder %s44, %s45
      %p56 = scmp.eq.s32.totalorder %s22, 0
      %p57 = por %p55, %p56
      %p58 = scmp.ne.s32.totalorder %s44, %s45
      %p59 = scmp.eq.s32.totalorder %s23, 1
      %p60 = por %p58, %p59
      %p62 = scmp.ne.s32.totalorder %s45, %s61
      %p63 = scmp.eq.s32.totalorder %s23, 0
      %p64 = por %p62, %p63
      %s65 = ssub.s32 %s24, %s36
      %p66 = scmp.eq.s32.totalorder %s65, 0
      %s68 = sadd.s32 %s67, 1
      %s69 = scalar_select %p66, %s67, %s68
      %p72 = pneg %p66
      %p73 = scmp.eq.s32.totalorder %s17, 1
      %p74 = por %p72, %p73
      %p75 = scmp.ne.s32.totalorder %s67, %s70
      %p76 = scmp.eq.s32.totalorder %s17, 0
      %p77 = por %p75, %p76
      %p78 = scmp.ne.s32.totalorder %s67, %s70
      %p79 = scmp.eq.s32.totalorder %s22, 1
      %p80 = por %p78, %p79
      %p81 = scmp.ne.s32.totalorder %s70, %s71
      %p82 = scmp.eq.s32.totalorder %s22, 0
      %p83 = por %p81, %p82
      %p84 = scmp.ne.s32.totalorder %s70, %s71
      %p85 = scmp.eq.s32.totalorder %s23, 1
      %p86 = por %p84, %p85
      %p88 = scmp.ne.s32.totalorder %s71, %s87
      %p89 = scmp.eq.s32.totalorder %s23, 0
      %p90 = por %p88, %p89
      %s91 = ssub.s32 %s25, %s32
      %s92 = ssub.s32 %s24, %s36
      %s93 = sor.u32 %s91, %s92
      %p94 = scmp.eq.s32.totalorder %s93, 0
      %s96 = sadd.s32 %s95, 1
      %s97 = scalar_select %p94, %s95, %s96
      %p100 = pneg %p94
      %p101 = scmp.eq.s32.totalorder %s17, 1
      %p102 = por %p100, %p101
      %p103 = scmp.ne.s32.totalorder %s95, %s98
      %p104 = scmp.eq.s32.totalorder %s17, 0
      %p105 = por %p103, %p104
      %p106 = scmp.ne.s32.totalorder %s95, %s98
      %p107 = scmp.eq.s32.totalorder %s22, 1
      %p108 = por %p106, %p107
      %p109 = scmp.ne.s32.totalorder %s98, %s99
      %p110 = scmp.eq.s32.totalorder %s22, 0
      %p111 = por %p109, %p110
      %p112 = scmp.ne.s32.totalorder %s98, %s99
      %p113 = scmp.eq.s32.totalorder %s23, 1
      %p114 = por %p112, %p113
      %p116 = scmp.ne.s32.totalorder %s99, %s115
      %p117 = scmp.eq.s32.totalorder %s23, 0
      %p118 = por %p116, %p117
      %p119 = scmp.le.s32.totalorder 1, %s17
      %p120 = scmp.lt.s32.totalorder %s17, 3
      %p121 = pnand %p119, %p120
      %p122 = pneg %p121
      // Predicated region
      $region9: #{tpu_custom_call.1} parent=5 // pred_check
        _
      $region10: #{tpu_custom_call.1} parent=5 // pred_check_branch
        %124 = sbr.rel (%p121) target = $region12
      $region11: #{tpu_custom_call.1} parent=5 // pred_region
        %s125 = ssub.s32 %s17, 1
      $region12: #{tpu_custom_call.1} parent=5 // pred_fallthru
        _
      %p126 = scmp.lt.s32.totalorder %s17, 2
      // Predicated region
      $region13: #{tpu_custom_call.1} parent=5 // pred_check
        %p127 = pneg %p126
      $region14: #{tpu_custom_call.1} parent=5 // pred_check_branch
        %129 = sbr.rel (%p127) target = $region16
      $region15: #{tpu_custom_call.1} parent=5 // pred_region
        // Predicated region
        $region17: #{tpu_custom_call.1} parent=15 // pred_check
          %p130 = pneg %p51
        $region18: #{tpu_custom_call.1} parent=15 // pred_check_branch
          %132 = sbr.rel (%p130) target = $region20
        $region19: #{tpu_custom_call.1} parent=15 // pred_region
          %s133 = sand.u32 %s41, 1
          %s134 = scalar_lea.sflag [#allocation3], %s133
          %s135 = sand.u32 %s41, 1
          %s136 = smul.addr %s135, 4
          %s137 = scalar_lea.vmem [#allocation2], %s136
          %s138 = smul.u32 2, %s24
          %140 = vsyncadd %s134, 0
          %s141 = smul.addr %s25, 4
          %s142 = sadd.s32 %s138, %s141
          %s143 = smul.addr %s142, 2
          %s144 = scalar_lea.hbm %s0, %s143
          %s146 = sshll.u32 %s144, 4
          %s147 = int_to_ptr.hbm [resolvable:$true] %s146
          %s148 = sshll.u32 %s137, 4
          %s149 = int_to_ptr.vmem [resolvable:$true] %s148
          %151 = dma.hbm_to_vmem [thread:$0]  %s147, 64, %s149, %s134
        $region20: #{tpu_custom_call.1} parent=15 // pred_fallthru
          _
        // Predicated region
        $region21: #{tpu_custom_call.1} parent=15 // pred_check
          %p152 = pneg %p77
        $region22: #{tpu_custom_call.1} parent=15 // pred_check_branch
          %154 = sbr.rel (%p152) target = $region24
        $region23: #{tpu_custom_call.1} parent=15 // pred_region
          %s155 = sand.u32 %s67, 1
          %s156 = scalar_lea.sflag [#allocation6], %s155
          %s157 = sand.u32 %s67, 1
          %s158 = smul.addr %s157, 2
          %s159 = scalar_lea.vmem [#allocation5], %s158
          %s160 = smul.u32 2, %s24
          %162 = vsyncadd %s156, 0
          %s163 = scalar_lea.hbm %s1, %s160
          %s165 = sshll.u32 %s163, 4
          %s166 = int_to_ptr.hbm [resolvable:$true] %s165
          %s167 = sshll.u32 %s159, 4
          %s168 = int_to_ptr.vmem [resolvable:$true] %s167
          %170 = dma.hbm_to_vmem [thread:$0]  %s166, 32, %s168, %s156
        $region24: #{tpu_custom_call.1} parent=15 // pred_fallthru
          _
      $region16: #{tpu_custom_call.1} parent=5 // pred_fallthru
        _
      %p171 = scmp.le.s32.totalorder 1, %s17
      %p172 = scmp.lt.s32.totalorder %s17, 3
      %p173 = pnand %p171, %p172
      %p174 = pneg %p173
      // Predicated region
      $region25: #{tpu_custom_call.1} parent=5 // pred_check
        _
      $region26: #{tpu_custom_call.1} parent=5 // pred_check_branch
        %176 = sbr.rel (%p173) target = $region28
      $region27: #{tpu_custom_call.1} parent=5 // pred_region
        %s177 = ssub.s32 %s17, 1
        %s178 = sand.u32 %s44, 1
        %s179 = scalar_lea.sflag [#allocation3], %s178
        %s180 = sand.u32 %s44, 1
        %s181 = smul.addr %s180, 4
        %s182 = scalar_lea.vmem [#allocation2], %s181
        // Predicated region
        $region29: #{tpu_custom_call.1} parent=27 // pred_check
          %p183 = pneg %p57
        $region30: #{tpu_custom_call.1} parent=27 // pred_check_branch
          %185 = sbr.rel (%p183) target = $region32
        $region31: #{tpu_custom_call.1} parent=27 // pred_region
          %187 = dma.done %s179, 64
        $region32: #{tpu_custom_call.1} parent=27 // pred_fallthru
          _
        %s188 = sand.u32 %s70, 1
        %s189 = scalar_lea.sflag [#allocation6], %s188
        %s190 = sand.u32 %s70, 1
        %s191 = smul.addr %s190, 2
        %s192 = scalar_lea.vmem [#allocation5], %s191
        // Predicated region
        $region33: #{tpu_custom_call.1} parent=27 // pred_check
          %p193 = pneg %p83
        $region34: #{tpu_custom_call.1} parent=27 // pred_check_branch
          %195 = sbr.rel (%p193) target = $region36
        $region35: #{tpu_custom_call.1} parent=27 // pred_region
          %197 = dma.done %s189, 32
        $region36: #{tpu_custom_call.1} parent=27 // pred_fallthru
          _
        %s198 = sand.u32 %s44, 1
        %s199 = scalar_lea.sflag [#allocation3], %s198
        %s200 = sand.u32 %s44, 1
        %s201 = smul.addr %s200, 4
        %s202 = scalar_lea.vmem [#allocation2], %s201
        %p203 = pneg %p57
        %p204 = pneg %p54
        %s205 = sand.u32 %s70, 1
        %s206 = scalar_lea.sflag [#allocation6], %s205
        %s207 = sand.u32 %s70, 1
        %s208 = smul.addr %s207, 2
        %s209 = scalar_lea.vmem [#allocation5], %s208
        %p210 = pneg %p83
        %p211 = pneg %p80
        %p212 = pneg %p111
        %p213 = pneg %p108
        %s214 = sand.u32 %s98, 1
        %s215 = scalar_lea.sflag [#allocation4], %s214
        %s216 = sand.u32 %s98, 1
        %s217 = smul.addr %s216, 4
        %s218 = scalar_lea.vmem [#allocation7], %s217
        %s219 = smul.u32 2, %s26
        %s220 = smul.u32 2, %s26
        %s221 = smul.u32 2, %s26
        %v222 = vld [vmem:[%s182] sm:$0xf]
        %v223 = vld [vmem:[%s192] sm:$0x3]
        %v225 = vperm.slane %v223, 0
        %v226 = vperm.slane %v223, 1
        %v227 = vrot.slane %v226, 6
        %vm228 = vcmask 1041408
        %v229 = vsel %vm228, %v225, %v227
        %v231 = vadd.f32 %v222, %v229
        %232 = vst [vmem:[%s218] sm:$0xf] %v231
        %s233 = sand.u32 %s98, 1
        %s234 = scalar_lea.sflag [#allocation4], %s233
        %s235 = sand.u32 %s98, 1
        %s236 = smul.addr %s235, 4
        %s237 = scalar_lea.vmem [#allocation7], %s236
        // Predicated region
        $region37: #{tpu_custom_call.1} parent=27 // pred_check
          %p238 = pneg %p108
        $region38: #{tpu_custom_call.1} parent=27 // pred_check_branch
          %240 = sbr.rel (%p238) target = $region40
        $region39: #{tpu_custom_call.1} parent=27 // pred_region
          %s241 = smul.u32 2, %s26
          %243 = vsyncadd %s234, 0
          %s244 = smul.addr %s27, 4
          %s245 = sadd.s32 %s241, %s244
          %s246 = smul.addr %s245, 2
          %s247 = scalar_lea.hbm %s2, %s246
          %s249 = sshll.u32 %s237, 4
          %s250 = int_to_ptr.vmem [resolvable:$true] %s249
          %s251 = sshll.u32 %s247, 4
          %s252 = int_to_ptr.hbm [resolvable:$true] %s251
          %254 = dma.vmem_to_hbm [thread:$0]  %s250, 64, %s252, %s234
        $region40: #{tpu_custom_call.1} parent=27 // pred_fallthru
          _
      $region28: #{tpu_custom_call.1} parent=5 // pred_fallthru
        _
      %p255 = scmp.le.s32.totalorder 2, %s17
      // Predicated region
      $region41: #{tpu_custom_call.1} parent=5 // pred_check
        %p256 = pneg %p255
      $region42: #{tpu_custom_call.1} parent=5 // pred_check_branch
        %258 = sbr.rel (%p256) target = $region44
      $region43: #{tpu_custom_call.1} parent=5 // pred_region
        %s259 = ssub.s32 %s17, 2
        // Predicated region
        $region45: #{tpu_custom_call.1} parent=43 // pred_check
          %p260 = pneg %p114
        $region46: #{tpu_custom_call.1} parent=43 // pred_check_branch
          %262 = sbr.rel (%p260) target = $region48
        $region47: #{tpu_custom_call.1} parent=43 // pred_region
          %s263 = sand.u32 %s99, 1
          %s264 = scalar_lea.sflag [#allocation4], %s263
          %s265 = sand.u32 %s99, 1
          %s266 = smul.addr %s265, 4
          %s267 = scalar_lea.vmem [#allocation7], %s266
          %269 = dma.done %s264, 64
        $region48: #{tpu_custom_call.1} parent=43 // pred_fallthru
          _
      $region44: #{tpu_custom_call.1} parent=5 // pred_fallthru
        _
    $region6: #{tpu_custom_call.1} parent=1 // loop_footer
      %s21 = sadd.s32 1, %s17
    $region7: #{tpu_custom_call.1} parent=1 // loop_footer_branch
      %16 = sbr.rel target = $region3
    $region8: #{tpu_custom_call.1} parent=1 // loop_exit
      _
    %270 = vsyncpa [#allocation3], 1
    %s271 = scalar_lea.sflag [#allocation3], 1
    %272 = vsyncpa %s271, 1
    %273 = vsyncpa [#allocation6], 1
    %s274 = scalar_lea.sflag [#allocation6], 1
    %275 = vsyncpa %s274, 1
    %276 = vsyncpa [#allocation4], 1
    %s277 = scalar_lea.sflag [#allocation4], 1
    %278 = vsyncpa %s277, 1

</llo_original>
